<compile_context>
chip_gen: v5e
topology: v5e:2x2
jax: 0.10.0
libtpu: 0.0.40
codegen_flags: <defaults>
</compile_context>

<pallas_src>
import functools

import jax
import jax.numpy as jnp
from jax.experimental import pallas as pl
from jax.experimental.pallas import tpu as pltpu


def _round_up(x, m):
    return (x + m - 1) // m * m


def _first_decoder_kernel(x_ref, w_ref, b_ref, o_ref, *, compute_dtype):
    # In-kernel cast of x (x stays f32 in HBM), MXU matmul with f32 accumulation,
    # f32 bias + ReLU epilogue, cast to the requested output dtype on store.
    x = x_ref[...].astype(compute_dtype)
    y = jnp.dot(x, w_ref[...], preferred_element_type=jnp.float32)
    y = y + b_ref[...]                       # (1, tn) f32 bias broadcasts over rows
    o_ref[...] = jnp.maximum(y, 0.0).astype(o_ref.dtype)


def prepare_first_decoder_params(weight, bias, *, compute_dtype=jnp.bfloat16):
    """One-time parameter prep, hoisted out of the per-forward path.

    weight: (out, f_c) PyTorch nn.Linear layout; bias: (out,).
    Returns (w_t, b2d, out_dim): w_t is (f_c, out_pad) in `compute_dtype`
    (out_pad = next multiple of 128 for lane-dense stores), b2d is (1, out_pad)
    f32.  Pass compute_dtype=jnp.float32 for bit-faithful f32 MXU operands.
    """
    out_dim, f_c = weight.shape
    out_pad = _round_up(out_dim, 128)
    w_t = jnp.asarray(weight).T.astype(compute_dtype)          # (f_c, out)
    b = jnp.asarray(bias).astype(jnp.float32)
    if out_pad != out_dim:
        w_t = jnp.pad(w_t, ((0, 0), (0, out_pad - out_dim)))
        b = jnp.pad(b, (0, out_pad - out_dim))
    return w_t, b.reshape(1, out_pad), out_dim


@functools.partial(jax.jit, static_argnames=("out_dim", "out_dtype"))
def first_decoder_apply(x, w_t, b2d, *, out_dim, out_dtype=jnp.bfloat16):
    """ReLU(x @ W^T + b) with pre-prepared (w_t, b2d) from prepare_*_params."""
    B, f_c = x.shape
    f_c_w, out_pad = w_t.shape
    assert f_c_w == f_c, "x feature dim must match prepared weight"
    x_bytes = jnp.dtype(x.dtype).itemsize
    w_ibytes = jnp.dtype(w_t.dtype).itemsize
    o_bytes = jnp.dtype(out_dtype).itemsize

    # ---- generation-aware VMEM budget (v7x 64 MiB/TC, v5e/v6e 128 MiB) -------
    try:
        vmem_cap = int(pltpu.get_tpu_info().vmem_capacity_bytes)
    except Exception:
        vmem_cap = 64 << 20                          # conservative (v7x per-TC)
    budget = min(int(vmem_cap * 0.45), 48 << 20)     # working-set budget

    # ---- N (output) tiling: keep the whole width resident if it fits its
    # share of the budget; otherwise fall back to 128-lane multiples. ---------
    n_blocks128 = out_pad // 128
    budget_w = budget // 2
    nn, tn = n_blocks128, 128
    for cand in range(1, n_blocks128 + 1):
        if n_blocks128 % cand:
            continue
        tn_c = out_pad // cand
        if 2 * (f_c * tn_c * w_ibytes + tn_c * 4) <= budget_w:
            nn, tn = cand, tn_c
            break
    # NOTE: weight/bias are double-buffered by the default pipeline even with a
    # constant index_map; pipeline_mode=pl.Buffered(1) would reclaim that copy.
    w_vmem = 2 * (f_c * tn * w_ibytes + tn * 4)

    # ---- batch tile: largest tm that fits the budget, but capped so the batch
    # grid has >= 2 (target 4) steps for pipelining / both v7x TensorCores. ----
    per_row = 2 * (f_c * x_bytes + tn * o_bytes)     # double-buffered x-in, out
    tm_cap = max((budget - w_vmem) // max(per_row, 1), 16)
    if B > 64:
        tm_target = -(-B // 4)
    elif B > 32:
        tm_target = -(-B // 2)
    else:
        tm_target = B
    tm = _round_up(tm_target, 16)                    # bf16 sublane packing
    tm = min(tm, int(tm_cap) // 16 * 16, 2048)
    if tm >= 256:
        tm = tm // 128 * 128                         # MXU-friendly M multiples
    tm = max(tm, 16)

    B_pad = _round_up(B, tm)
    x_p = jnp.pad(x, ((0, B_pad - B), (0, 0))) if B_pad != B else x
    grid = (B_pad // tm, nn)

    needed = w_vmem + 2 * tm * f_c * x_bytes + 2 * tm * tn * o_bytes
    vmem_limit = int(min(max(1.25 * needed + (2 << 20), 16 << 20),
                         vmem_cap - (8 << 20),       # headroom on v7x (<= 56 MiB)
                         100 << 20))                 # generous cap on v5e/v6e

    cost = pl.CostEstimate(
        flops=2 * B_pad * f_c * out_pad,
        transcendentals=0,
        bytes_accessed=(B_pad * f_c * x_bytes + f_c * out_pad * w_ibytes
                        + out_pad * 4 + B_pad * out_pad * o_bytes),
    )

    kernel = functools.partial(_first_decoder_kernel, compute_dtype=w_t.dtype)

    y = pl.pallas_call(
        kernel,
        out_shape=jax.ShapeDtypeStruct((B_pad, out_pad), out_dtype),
        grid=grid,
        in_specs=[
            pl.BlockSpec((tm, f_c), lambda i, j: (i, 0)),     # batch-tiled x (f32)
            pl.BlockSpec((f_c, tn), lambda i, j: (0, j)),     # resident weight
            pl.BlockSpec((1, tn), lambda i, j: (0, j)),       # resident bias
        ],
        out_specs=pl.BlockSpec((tm, tn), lambda i, j: (i, j)),
        compiler_params=pltpu.CompilerParams(
            dimension_semantics=("parallel", "parallel"),     # 2 TCs on v7x
            vmem_limit_bytes=vmem_limit,
        ),
        cost_estimate=cost,
    )(x_p, w_t, b2d)

    return y[:B, :out_dim]


def first_decoder(x, weight, bias, *, compute_dtype=jnp.bfloat16,
                  out_dtype=jnp.bfloat16):
    """Convenience one-shot wrapper (prefer prepare once + apply many)."""
    w_t, b2d, out_dim = prepare_first_decoder_params(
        weight, bias, compute_dtype=compute_dtype)
    return first_decoder_apply(x, w_t, b2d, out_dim=out_dim, out_dtype=out_dtype)


if __name__ == "__main__":
    # Module hyperparameters (small, forward-consistent shapes).
    W_s, C, f_c = 8, 16, 32
    out_dim = W_s * C        # 128
    B = 8                    # batch

    key = jax.random.PRNGKey(0)
    k_x, k_w, k_b = jax.random.split(key, 3)

    # PyTorch nn.Linear layout: weight (out, f_c), bias (out,)
    weight = jax.random.normal(k_w, (out_dim, f_c), dtype=jnp.float32) * 0.05
    bias = jax.random.normal(k_b, (out_dim,), dtype=jnp.float32) * 0.05
    x = jax.random.normal(k_x, (B, f_c), dtype=jnp.float32)

    # One-time parameter prep (hoisted out of the per-call path), then apply.
    w_t, b2d, odim = prepare_first_decoder_params(weight, bias)

    # Default fast path: bf16 output.
    y = first_decoder_apply(x, w_t, b2d, out_dim=odim)
    jax.block_until_ready(y)
    assert y.shape == (B, out_dim) and y.dtype == jnp.bfloat16

    # Reference with the same bf16 operand quantization (f32 accumulation).
    xq = x.astype(jnp.bfloat16).astype(jnp.float32)
    wq = weight.astype(jnp.bfloat16).astype(jnp.float32)
    y_ref_q = jnp.maximum(xq @ wq.T + bias, 0.0)
    assert jnp.allclose(y.astype(jnp.float32), y_ref_q, atol=2e-2, rtol=2e-2)

    # f32-output path: tight check vs the quantized reference, loose vs pure f32.
    y32 = first_decoder_apply(x, w_t, b2d, out_dim=odim, out_dtype=jnp.float32)
    jax.block_until_ready(y32)
    assert jnp.allclose(y32, y_ref_q, atol=1e-5, rtol=1e-5)
    y_ref = jnp.maximum(x @ weight.T + bias, 0.0)
    assert jnp.allclose(y32, y_ref, atol=3e-2, rtol=3e-2)

    # Second instantiation: output not a multiple of 128 and batch not a
    # multiple of the tile -> exercises pad + slice and a multi-step batch grid.
    W_s2, C2, f_c2, B2 = 5, 20, 48, 200      # out_dim = 100
    k_x2, k_w2, k_b2 = jax.random.split(jax.random.PRNGKey(1), 3)
    w2 = jax.random.normal(k_w2, (W_s2 * C2, f_c2), dtype=jnp.float32) * 0.05
    b2 = jax.random.normal(k_b2, (W_s2 * C2,), dtype=jnp.float32) * 0.05
    x2 = jax.random.normal(k_x2, (B2, f_c2), dtype=jnp.float32)
    y2 = first_decoder(x2, w2, b2, out_dtype=jnp.float32)
    jax.block_until_ready(y2)
    xq2 = x2.astype(jnp.bfloat16).astype(jnp.float32)
    wq2 = w2.astype(jnp.bfloat16).astype(jnp.float32)
    y2_ref = jnp.maximum(xq2 @ wq2.T + b2, 0.0)
    assert y2.shape == (B2, W_s2 * C2)
    assert jnp.allclose(y2, y2_ref, atol=1e-5, rtol=1e-5)

    print("KERNEL_OK")
</pallas_src>

<mosaic_0001>
module attributes {stable_mosaic.version = 11 : i64} {
  func.func @_first_decoder_kernel(%arg0: i32, %arg1: i32, %arg2: memref<16x32xf32, #tpu.memory_space<vmem>>, %arg3: memref<32x128xbf16, #tpu.memory_space<vmem>>, %arg4: memref<1x128xf32, #tpu.memory_space<vmem>>, %arg5: memref<16x128xbf16, #tpu.memory_space<vmem>>) attributes {dimension_semantics = [#tpu.dimension_semantics<parallel>, #tpu.dimension_semantics<parallel>], iteration_bounds = array<i64: 1, 1>, scalar_prefetch = 0 : i64, scratch_operands = 0 : i64, tpu.core_type = #tpu.core_type<tc>, window_params = [{transform_indices = @transform_0, window_bounds = array<i64: 16, 32>}, {transform_indices = @transform_1, window_bounds = array<i64: 32, 128>}, {transform_indices = @transform_2, window_bounds = array<i64: 1, 128>}, {transform_indices = @transform_3, window_bounds = array<i64: 16, 128>}]} {
    %c0 = arith.constant 0 : index
    %c0_0 = arith.constant 0 : index
    %0 = vector.load %arg2[%c0, %c0_0] : memref<16x32xf32, #tpu.memory_space<vmem>>, vector<16x32xf32>
    %1 = arith.truncf %0 : vector<16x32xf32> to vector<16x32xbf16>
    %c0_1 = arith.constant 0 : index
    %c0_2 = arith.constant 0 : index
    %2 = vector.load %arg3[%c0_1, %c0_2] : memref<32x128xbf16, #tpu.memory_space<vmem>>, vector<32x128xbf16>
    %cst = arith.constant dense<0.000000e+00> : vector<16x128xf32>
    %3 = tpu.matmul %1, %2, %cst {dimension_numbers = #tpu.dot_dimension_numbers<[1], [0], [0], [1], [0, 0, 1, 1], [], []>} : vector<16x32xbf16>, vector<32x128xbf16>, vector<16x128xf32> -> vector<16x128xf32>
    %c0_3 = arith.constant 0 : index
    %c0_4 = arith.constant 0 : index
    %4 = vector.load %arg4[%c0_3, %c0_4] : memref<1x128xf32, #tpu.memory_space<vmem>>, vector<1x128xf32>
    %5 = vector.broadcast %4 : vector<1x128xf32> to vector<16x128xf32>
    %6 = arith.addf %3, %5 : vector<16x128xf32>
    %cst_5 = arith.constant 0.000000e+00 : f32
    %7 = vector.broadcast %cst_5 : f32 to vector<16x128xf32>
    %8 = arith.maximumf %6, %7 : vector<16x128xf32>
    %9 = arith.truncf %8 : vector<16x128xf32> to vector<16x128xbf16>
    %c0_6 = arith.constant 0 : index
    %c0_7 = arith.constant 0 : index
    %10 = vector.load %arg5[%c0_6, %c0_7] : memref<16x128xbf16, #tpu.memory_space<vmem>>, vector<16x128xbf16>
    tpu.vector_store %arg5[%c0_6, %c0_7], %9 {strides = array<i32>} : memref<16x128xbf16, #tpu.memory_space<vmem>>, vector<16x128xbf16>,
    return
  }
  func.func @transform_0(%arg0: i32, %arg1: i32) -> (i32, i32) {
    %c0_i32 = arith.constant 0 : i32
    %c0_i32_0 = arith.constant 0 : i32
    return %arg0, %c0_i32 : i32, i32
  }
  func.func @transform_1(%arg0: i32, %arg1: i32) -> (i32, i32) {
    %c0_i32 = arith.constant 0 : i32
    %c0_i32_0 = arith.constant 0 : i32
    return %c0_i32, %arg1 : i32, i32
  }
  func.func @transform_2(%arg0: i32, %arg1: i32) -> (i32, i32) {
    %c0_i32 = arith.constant 0 : i32
    %c0_i32_0 = arith.constant 0 : i32
    return %c0_i32, %arg1 : i32, i32
  }
  func.func @transform_3(%arg0: i32, %arg1: i32) -> (i32, i32) {
    %c0_i32 = arith.constant 0 : i32
    return %arg0, %arg1 : i32, i32
  }
}

</mosaic_0001>

<llo_original>
// kernel: first_decoder_apply.1
$region0: #{first_decoder_apply.1}
  #allocation0 [shape = 'u32[]', space=smem, size = 0x4, offset = 0x4, fixed_abs, tag = 'smem constant byte address 0x4 - core index']
  #allocation1 [shape = 'u32[72,128]{1,0:T(1,128)}', space=vmem, size = 0x9000, scoped, tag = 'internal scratch']
  %s0 = inlined_call_operand.vmem [shape: f32[16,32], index: 0, kind: input, shape index: {}]
  %s1 = inlined_call_operand.vmem [shape: bf16[32,128], index: 1, kind: input, shape index: {}]
  %s2 = inlined_call_operand.vmem [shape: f32[1,128], index: 2, kind: input, shape index: {}]
  %s3 = inlined_call_operand.vmem [shape: bf16[16,128], index: 3, kind: output, shape index: {}]
  %s4 = sld [smem:[#allocation0]]
  $region22: #{first_decoder_apply.1} parent=0
    _
  %s6 = ssub.s32 1, %s4
  %s7 = scalar_select 0, %s6, %s4
  // Predicated region
  $region2: #{first_decoder_apply.1} parent=0 // pred_check
    _
  $region3: #{first_decoder_apply.1} parent=0 // pred_check_branch
    %9 = sbr.rel (0) target = $region5
  $region4: #{first_decoder_apply.1} parent=0 // pred_region
    _
  $region5: #{first_decoder_apply.1} parent=0 // pred_fallthru
    _
  // Predicated region
  $region6: #{first_decoder_apply.1} parent=0 // pred_check
    _
  $region7: #{first_decoder_apply.1} parent=0 // pred_check_branch
    %11 = sbr.rel (0) target = $region9
  $region8: #{first_decoder_apply.1} parent=0 // pred_region
    _
  $region9: #{first_decoder_apply.1} parent=0 // pred_fallthru
    _
  // Predicated region
  $region10: #{first_decoder_apply.1} parent=0 // pred_check
    _
  $region11: #{first_decoder_apply.1} parent=0 // pred_check_branch
    %13 = sbr.rel (0) target = $region13
  $region12: #{first_decoder_apply.1} parent=0 // pred_region
    _
  $region13: #{first_decoder_apply.1} parent=0 // pred_fallthru
    _
  %v15 = vld [vmem:[%s0] sm:$0xff]
  %v16 = vld [vmem:[%s0 + $0x8] sm:$0xff]
  %v17 = vpack.c.bf16 %v16, %v15
  %v18 = vld [vmem:[%s1] sm:$0xf]
  %v19 = vld [vmem:[%s1 + $0x4] sm:$0xf]
  %v20 = vld [vmem:[%s1 + $0x8] sm:$0xf]
  %v21 = vld [vmem:[%s1 + $0xc] sm:$0xf]
  %v22 = vld [vmem:[%s2] sm:$0x1]
  %v24 = vperm.slane %v22, 0
  %v30 = vunpack.c.l.b16 %v18
  %v31 = vunpack.c.l.b16 %v19
  %v32 = vunpack.c.l.b16 %v20
  %v33 = vunpack.c.l.b16 %v21
  %v34 = vpack.c.b16 %v31, %v30
  %v35 = vpack.c.b16 %v33, %v32
  %vm38 = vcmask 261120
  %v40 = vsel %vm38, %v17, 0
  %42 = vmatpush.bf16.msra.mxu0 0
  %43 = vmatpush.bf16.msra.mxu0 0
  %44 = vmatpush.bf16.msra.mxu0 0
  %45 = vmatpush.bf16.msra.mxu0 0
  %46 = vmatpush.bf16.msra.mxu0 0
  %47 = vmatpush.bf16.msra.mxu0 0
  %48 = vmatpush.bf16.msra.mxu0 %v35
  %49 = vmatpush.bf16.msra.mxu0 %v34
  %50 = vmatmul.bf16.gmra.mxu0 %v40
  %v51 = vpop.f32.mrf.mxu0
  %v52 = vadd.f32 %v24, %v51
  %v53 = vpop.f32.mrf.mxu0
  %v54 = vadd.f32 %v24, %v53
  %55 = vdwg.mxu0
  %v56 = vmax.f32 %v52, 0.0
  %v57 = vmax.f32 %v54, 0.0
  %v58 = vpack.c.bf16 %v56, %v56
  %v59 = vpack.c.bf16 %v57, %v57
  %60 = vst [vmem:[%s3] sm:$0xf] %v58
  %61 = vst [vmem:[%s3 + $0x4] sm:$0xf] %v59
  // Predicated region
  $region14: #{first_decoder_apply.1} parent=0 // pred_check
    _
  $region15: #{first_decoder_apply.1} parent=0 // pred_check_branch
    %63 = sbr.rel (0) target = $region17
  $region16: #{first_decoder_apply.1} parent=0 // pred_region
    _
  $region17: #{first_decoder_apply.1} parent=0 // pred_fallthru
    _
  // Predicated region
  $region18: #{first_decoder_apply.1} parent=0 // pred_check
    _
  $region19: #{first_decoder_apply.1} parent=0 // pred_check_branch
    %65 = sbr.rel (0) target = $region21
  $region20: #{first_decoder_apply.1} parent=0 // pred_region
    _
  $region21: #{first_decoder_apply.1} parent=0 // pred_fallthru
    _

</llo_original>
